<compile_context>
chip_gen: v5e
topology: v5e:2x2
jax: 0.10.0
libtpu: 0.0.40
codegen_flags: <defaults>
</compile_context>

<pallas_src>
import functools
import math

import jax
import jax.numpy as jnp
from jax.experimental import pallas as pl
from jax.experimental.pallas import tpu as pltpu


def _round_up(x: int, mult: int) -> int:
    return (x + mult - 1) // mult * mult


def _vmem_limit_bytes() -> int:
    """Generation-aware scoped-VMEM limit: ~48 MiB on v7x (64 MiB physical),
    ~96 MiB on v5e/v6e (128 MiB physical)."""
    try:
        cap = int(pltpu.get_tpu_info().vmem_capacity_bytes)
    except Exception:  # pragma: no cover - conservative fallback, safe everywhere
        cap = 64 * 1024 * 1024
    return min((cap * 3) // 4, 100 * 1024 * 1024)


# --------------------------------------------------------------------------- #
# Pass 1: normalize + fold 1/sqrt(T) + lane-pad + cast to bf16, and emit the
# per-pair positive logits / per-row self-similarities in f32.
# --------------------------------------------------------------------------- #
def _prep_kernel(z1_ref, z2_ref, zn_ref, pair_ref, d1_ref, d2_ref, *,
                 inv_sqrt_temp: float, d: int, d_pad: int):
    z1 = z1_ref[...]
    z2 = z2_ref[...]
    ssq1 = jnp.sum(z1 * z1, axis=-1, keepdims=True)
    ssq2 = jnp.sum(z2 * z2, axis=-1, keepdims=True)
    # x / max(||x||, 1e-12) == x * rsqrt(max(||x||^2, 1e-24)); rsqrt -> EUP slot.
    zn1 = z1 * (jax.lax.rsqrt(jnp.maximum(ssq1, 1e-24)) * inv_sqrt_temp)
    zn2 = z2 * (jax.lax.rsqrt(jnp.maximum(ssq2, 1e-24)) * inv_sqrt_temp)

    # Folded logits in f32 (exact w.r.t. the normalized rows):
    #   pair = (zhat1 . zhat2) / T, d1 = ||zhat1||^2 / T, d2 = ||zhat2||^2 / T.
    pair_ref[...] = jnp.sum(zn1 * zn2, axis=-1, keepdims=True)
    d1_ref[...] = jnp.sum(zn1 * zn1, axis=-1, keepdims=True)
    d2_ref[...] = jnp.sum(zn2 * zn2, axis=-1, keepdims=True)

    if d == d_pad:
        zn_ref[0, :, :] = zn1.astype(zn_ref.dtype)
        zn_ref[1, :, :] = zn2.astype(zn_ref.dtype)
    else:
        # Fused lane padding: zero the block, then store the valid lanes.
        zn_ref[...] = jnp.zeros_like(zn_ref)
        zn_ref[0, :, 0:d] = zn1.astype(zn_ref.dtype)
        zn_ref[1, :, 0:d] = zn2.astype(zn_ref.dtype)


# --------------------------------------------------------------------------- #
# Pass 2a (resident-K): one (TQ, d_pad) x (d_pad, m_pad) matmul per row tile.
# K uses a constant index_map -> fetched into VMEM once, never re-streamed.
# --------------------------------------------------------------------------- #
def _rowsum_resident_kernel(q_ref, k_ref, rs_ref, *, shift: float):
    s = jax.lax.dot_general(
        q_ref[...], k_ref[...],
        dimension_numbers=(((1,), (1,)), ((), ())),
        preferred_element_type=jnp.float32,
    )  # (TQ, m_pad) == (zn_q . zn_k) / T
    rs_ref[...] = jnp.sum(jnp.exp(s - shift), axis=-1, keepdims=True)


# --------------------------------------------------------------------------- #
# Pass 2b (tiled): flash-style (row x column-reduction) grid; column axis is the
# last ("arbitrary") grid axis; row sums accumulate in a VMEM scratch.
# --------------------------------------------------------------------------- #
def _rowsum_tiled_kernel(q_ref, k_ref, rs_ref, acc_ref, *, shift: float):
    j = pl.program_id(1)

    @pl.when(j == 0)
    def _():
        acc_ref[...] = jnp.zeros_like(acc_ref)

    s = jax.lax.dot_general(
        q_ref[...], k_ref[...],
        dimension_numbers=(((1,), (1,)), ((), ())),
        preferred_element_type=jnp.float32,
    )  # (TQ, TK)
    acc_ref[...] += jnp.sum(jnp.exp(s - shift), axis=-1, keepdims=True)

    @pl.when(j == pl.num_programs(1) - 1)
    def _():
        rs_ref[...] = acc_ref[...]


# --------------------------------------------------------------------------- #
# Wrapper
# --------------------------------------------------------------------------- #
def ntxent_loss(z1: jax.Array, z2: jax.Array, temperature: float = 0.5,
                force_path: str | None = None) -> jax.Array:
    assert z1.shape == z2.shape, (
        f"expect two tensors with same shape, got {z1.shape} vs {z2.shape}"
    )
    n, d = z1.shape
    m = 2 * n

    d_pad = max(128, _round_up(d, 128))
    n_pad = _round_up(n, 128)          # keeps every tile a multiple of (8,128)
    m_pad = 2 * n_pad

    shift = float(1.0 / temperature)               # 1/T, used as the exp shift
    inv_sqrt_temp = float(1.0 / math.sqrt(temperature))
    vmem_limit = _vmem_limit_bytes()

    z1f = z1.astype(jnp.float32)
    z2f = z2.astype(jnp.float32)
    if n_pad != n:
        # Small row pad only for awkward N; zero rows normalize to zero rows.
        z1f = jnp.pad(z1f, ((0, n_pad - n), (0, 0)))
        z2f = jnp.pad(z2f, ((0, n_pad - n), (0, 0)))

    # ---- Pass 1: normalize / fold / pad / cast (+ pair & diag logits). ---- #
    t1 = 128
    zn3, pair, diag1, diag2 = pl.pallas_call(
        functools.partial(_prep_kernel, inv_sqrt_temp=inv_sqrt_temp,
                          d=d, d_pad=d_pad),
        out_shape=(
            jax.ShapeDtypeStruct((2, n_pad, d_pad), jnp.bfloat16),
            jax.ShapeDtypeStruct((n_pad, 1), jnp.float32),
            jax.ShapeDtypeStruct((n_pad, 1), jnp.float32),
            jax.ShapeDtypeStruct((n_pad, 1), jnp.float32),
        ),
        grid=(n_pad // t1,),
        in_specs=[
            pl.BlockSpec((t1, d), lambda i: (i, 0)),
            pl.BlockSpec((t1, d), lambda i: (i, 0)),
        ],
        out_specs=(
            pl.BlockSpec((2, t1, d_pad), lambda i: (0, i, 0)),
            pl.BlockSpec((t1, 1), lambda i: (i, 0)),
            pl.BlockSpec((t1, 1), lambda i: (i, 0)),
            pl.BlockSpec((t1, 1), lambda i: (i, 0)),
        ),
        compiler_params=pltpu.CompilerParams(
            dimension_semantics=("parallel",),
            vmem_limit_bytes=vmem_limit,
        ),
    )(z1f, z2f)

    # Free reshape to the concat layout: rows [0, n_pad) = z1 half, rest = z2 half.
    zn = zn3.reshape(m_pad, d_pad)

    # ---- Pass 2: shifted exp row sums. ---- #
    resident_ok = (m_pad * d_pad * 2 <= 4 * 1024 * 1024) and (m_pad <= 4096)
    if force_path == "resident":
        use_resident = True
    elif force_path == "tiled":
        use_resident = False
    else:
        use_resident = resident_ok

    if use_resident:
        tq = m_pad // 2 if m_pad <= 512 else 256   # >= 2 row tiles (v7x megacore)
        rs = pl.pallas_call(
            functools.partial(_rowsum_resident_kernel, shift=shift),
            out_shape=jax.ShapeDtypeStruct((m_pad, 1), jnp.float32),
            grid=(m_pad // tq,),
            in_specs=[
                pl.BlockSpec((tq, d_pad), lambda i: (i, 0)),
                pl.BlockSpec((m_pad, d_pad), lambda i: (0, 0)),  # VMEM-resident K
            ],
            out_specs=pl.BlockSpec((tq, 1), lambda i: (i, 0)),
            compiler_params=pltpu.CompilerParams(
                dimension_semantics=("parallel",),
                vmem_limit_bytes=vmem_limit,
            ),
        )(zn, zn)
    else:
        tk = 256
        tq = 512 if (m_pad % 512 == 0 and m_pad >= 1024 and d_pad <= 2048) else 256
        n_col = m_pad // tk
        if n_col >= 4:
            k_spec = pl.BlockSpec((tk, d_pad), lambda i, j: (j, 0),
                                  pipeline_mode=pl.Buffered(3))
        else:
            k_spec = pl.BlockSpec((tk, d_pad), lambda i, j: (j, 0))
        rs = pl.pallas_call(
            functools.partial(_rowsum_tiled_kernel, shift=shift),
            out_shape=jax.ShapeDtypeStruct((m_pad, 1), jnp.float32),
            grid=(m_pad // tq, n_col),
            in_specs=[
                pl.BlockSpec((tq, d_pad), lambda i, j: (i, 0)),  # Q row tile
                k_spec,                                          # K column tile
            ],
            out_specs=pl.BlockSpec((tq, 1), lambda i, j: (i, 0)),
            scratch_shapes=[pltpu.VMEM((tq, 1), jnp.float32)],
            compiler_params=pltpu.CompilerParams(
                dimension_semantics=("parallel", "arbitrary"),
                vmem_limit_bytes=vmem_limit,
            ),
        )(zn, zn)

    # ---- Tiny JAX epilogue (O(m) work). ---- #
    rs = rs[:, 0]
    # Each all-zero pad column contributes exactly exp(-1/T) to a shifted row sum.
    n_zero_cols = m_pad - m
    if n_zero_cols > 0:
        rs = rs - float(n_zero_cols) * math.exp(-shift)

    rs1 = rs[:n]                       # z1 rows (concat layout)
    rs2 = rs[n_pad:n_pad + n]          # z2 rows
    pair = pair[:n, 0]                 # (zhat1_k . zhat2_k) / T
    e_d1 = jnp.exp(diag1[:n, 0] - shift)   # shifted self similarity (handles zero rows)
    e_d2 = jnp.exp(diag2[:n, 0] - shift)
    eps_shifted = 1e-8 * math.exp(-shift)

    # loss_i = log(row_sum - diag + 1e-8) - s_pair/T
    #        = 1/T + log(R_i - e_dii + 1e-8*exp(-1/T)) - pair_folded
    loss1 = shift + jnp.log(rs1 - e_d1 + eps_shifted) - pair
    loss2 = shift + jnp.log(rs2 - e_d2 + eps_shifted) - pair
    return (jnp.sum(loss1) + jnp.sum(loss2)) / m


# --------------------------------------------------------------------------- #
# Pure-JAX reference (mirrors the PyTorch module exactly, f32).
# --------------------------------------------------------------------------- #
def _ntxent_reference(z1, z2, temperature=0.5):
    n, d = z1.shape
    z = jnp.stack([z1.astype(jnp.float32), z2.astype(jnp.float32)],
                  axis=1).reshape(2 * n, d)
    norm = jnp.sqrt(jnp.sum(z * z, axis=-1, keepdims=True))
    zn = z / jnp.maximum(norm, 1e-12)
    sim = jnp.exp(zn @ zn.T / temperature)
    m = 2 * n
    idx = jnp.arange(m)
    pair = sim[idx, idx ^ 1]
    diag = sim[idx, idx]
    row_sum = jnp.sum(sim, axis=-1)
    losses = -jnp.log(pair / (row_sum - diag + 1e-8))
    return jnp.mean(losses)


if __name__ == "__main__":
    key = jax.random.PRNGKey(0)
    k1, k2, k3, k4, k5, k6 = jax.random.split(key, 6)
    # bf16 similarity operands -> loosened tolerance vs. the f32 reference.
    RTOL = ATOL = 2e-2

    # Case 1: canonical small shape (auto path selection -> resident-K).
    N, D = 8, 32
    z1 = jax.random.normal(k1, (N, D), dtype=jnp.float32)
    z2 = jax.random.normal(k2, (N, D), dtype=jnp.float32)
    ref = _ntxent_reference(z1, z2, temperature=0.5)
    out = ntxent_loss(z1, z2, temperature=0.5)
    jax.block_until_ready(out)
    assert jnp.allclose(out, ref, rtol=RTOL, atol=ATOL), (out, ref)

    # Case 2: non-multiple D (fused lane pad) + row padding; exercise both paths.
    N2, D2 = 24, 48
    z1b = jax.random.normal(k3, (N2, D2), dtype=jnp.float32)
    z2b = jax.random.normal(k4, (N2, D2), dtype=jnp.float32)
    ref2 = _ntxent_reference(z1b, z2b, temperature=0.5)
    out_res = ntxent_loss(z1b, z2b, temperature=0.5, force_path="resident")
    out_til = ntxent_loss(z1b, z2b, temperature=0.5, force_path="tiled")
    jax.block_until_ready((out_res, out_til))
    assert jnp.allclose(out_res, ref2, rtol=RTOL, atol=ATOL), (out_res, ref2)
    assert jnp.allclose(out_til, ref2, rtol=RTOL, atol=ATOL), (out_til, ref2)

    # Case 3: multi-tile tiled path (TQ=512 != TK=256, 4 column-reduction steps,
    # Buffered(3) K stream) — still computationally tiny.
    N3, D3 = 512, 64
    z1c = jax.random.normal(k5, (N3, D3), dtype=jnp.float32)
    z2c = jax.random.normal(k6, (N3, D3), dtype=jnp.float32)
    ref3 = _ntxent_reference(z1c, z2c, temperature=0.5)
    out3 = ntxent_loss(z1c, z2c, temperature=0.5, force_path="tiled")
    jax.block_until_ready(out3)
    assert jnp.allclose(out3, ref3, rtol=RTOL, atol=ATOL), (out3, ref3)

    print("KERNEL_OK")
</pallas_src>

<mosaic_0001>
module attributes {stable_mosaic.version = 11 : i64} {
  func.func @_prep_kernel(%arg0: i32, %arg1: memref<128x32xf32, #tpu.memory_space<vmem>>, %arg2: memref<128x32xf32, #tpu.memory_space<vmem>>, %arg3: memref<2x128x128xbf16, #tpu.memory_space<vmem>>, %arg4: memref<128x1xf32, #tpu.memory_space<vmem>>, %arg5: memref<128x1xf32, #tpu.memory_space<vmem>>, %arg6: memref<128x1xf32, #tpu.memory_space<vmem>>) attributes {dimension_semantics = [#tpu.dimension_semantics<parallel>], iteration_bounds = array<i64: 1>, scalar_prefetch = 0 : i64, scratch_operands = 0 : i64, tpu.core_type = #tpu.core_type<tc>, window_params = [{transform_indices = @transform_0, window_bounds = array<i64: 128, 32>}, {transform_indices = @transform_1, window_bounds = array<i64: 128, 32>}, {transform_indices = @transform_2, window_bounds = array<i64: 2, 128, 128>}, {transform_indices = @transform_3, window_bounds = array<i64: 128, 1>}, {transform_indices = @transform_4, window_bounds = array<i64: 128, 1>}, {transform_indices = @transform_5, window_bounds = array<i64: 128, 1>}]} {
    %c0 = arith.constant 0 : index
    %c0_0 = arith.constant 0 : index
    %0 = vector.load %arg1[%c0, %c0_0] : memref<128x32xf32, #tpu.memory_space<vmem>>, vector<128x32xf32>
    %c0_1 = arith.constant 0 : index
    %c0_2 = arith.constant 0 : index
    %1 = vector.load %arg2[%c0_1, %c0_2] : memref<128x32xf32, #tpu.memory_space<vmem>>, vector<128x32xf32>
    %2 = arith.mulf %0, %0 : vector<128x32xf32>
    %cst = arith.constant dense<0.000000e+00> : vector<128xf32>
    %3 = vector.multi_reduction <add>, %2, %cst [1] : vector<128x32xf32> to vector<128xf32>
    %4 = vector.shape_cast %3 : vector<128xf32> to vector<128x1xf32>
    %5 = arith.mulf %1, %1 : vector<128x32xf32>
    %cst_3 = arith.constant dense<0.000000e+00> : vector<128xf32>
    %6 = vector.multi_reduction <add>, %5, %cst_3 [1] : vector<128x32xf32> to vector<128xf32>
    %7 = vector.shape_cast %6 : vector<128xf32> to vector<128x1xf32>
    %cst_4 = arith.constant 1.000000e-24 : f32
    %8 = vector.broadcast %cst_4 : f32 to vector<128x1xf32>
    %9 = arith.maximumf %4, %8 : vector<128x1xf32>
    %10 = math.rsqrt %9 : vector<128x1xf32>
    %cst_5 = arith.constant 1.41421354 : f32
    %11 = vector.broadcast %cst_5 : f32 to vector<128x1xf32>
    %12 = arith.mulf %10, %11 : vector<128x1xf32>
    %13 = vector.broadcast %12 : vector<128x1xf32> to vector<128x32xf32>
    %14 = arith.mulf %0, %13 : vector<128x32xf32>
    %cst_6 = arith.constant 1.000000e-24 : f32
    %15 = vector.broadcast %cst_6 : f32 to vector<128x1xf32>
    %16 = arith.maximumf %7, %15 : vector<128x1xf32>
    %17 = math.rsqrt %16 : vector<128x1xf32>
    %cst_7 = arith.constant 1.41421354 : f32
    %18 = vector.broadcast %cst_7 : f32 to vector<128x1xf32>
    %19 = arith.mulf %17, %18 : vector<128x1xf32>
    %20 = vector.broadcast %19 : vector<128x1xf32> to vector<128x32xf32>
    %21 = arith.mulf %1, %20 : vector<128x32xf32>
    %22 = arith.mulf %14, %21 : vector<128x32xf32>
    %cst_8 = arith.constant dense<0.000000e+00> : vector<128xf32>
    %23 = vector.multi_reduction <add>, %22, %cst_8 [1] : vector<128x32xf32> to vector<128xf32>
    %24 = vector.shape_cast %23 : vector<128xf32> to vector<128x1xf32>
    %c0_9 = arith.constant 0 : index
    %c0_10 = arith.constant 0 : index
    %25 = vector.load %arg4[%c0_9, %c0_10] : memref<128x1xf32, #tpu.memory_space<vmem>>, vector<128x1xf32>
    tpu.vector_store %arg4[%c0_9, %c0_10], %24 {strides = array<i32>} : memref<128x1xf32, #tpu.memory_space<vmem>>, vector<128x1xf32>,
    %26 = arith.mulf %14, %14 : vector<128x32xf32>
    %cst_11 = arith.constant dense<0.000000e+00> : vector<128xf32>
    %27 = vector.multi_reduction <add>, %26, %cst_11 [1] : vector<128x32xf32> to vector<128xf32>
    %28 = vector.shape_cast %27 : vector<128xf32> to vector<128x1xf32>
    %c0_12 = arith.constant 0 : index
    %c0_13 = arith.constant 0 : index
    %29 = vector.load %arg5[%c0_12, %c0_13] : memref<128x1xf32, #tpu.memory_space<vmem>>, vector<128x1xf32>
    tpu.vector_store %arg5[%c0_12, %c0_13], %28 {strides = array<i32>} : memref<128x1xf32, #tpu.memory_space<vmem>>, vector<128x1xf32>,
    %30 = arith.mulf %21, %21 : vector<128x32xf32>
    %cst_14 = arith.constant dense<0.000000e+00> : vector<128xf32>
    %31 = vector.multi_reduction <add>, %30, %cst_14 [1] : vector<128x32xf32> to vector<128xf32>
    %32 = vector.shape_cast %31 : vector<128xf32> to vector<128x1xf32>
    %c0_15 = arith.constant 0 : index
    %c0_16 = arith.constant 0 : index
    %33 = vector.load %arg6[%c0_15, %c0_16] : memref<128x1xf32, #tpu.memory_space<vmem>>, vector<128x1xf32>
    tpu.vector_store %arg6[%c0_15, %c0_16], %32 {strides = array<i32>} : memref<128x1xf32, #tpu.memory_space<vmem>>, vector<128x1xf32>,
    %cst_17 = arith.constant 0.000000e+00 : bf16
    %34 = vector.broadcast %cst_17 : bf16 to vector<2x128x128xbf16>
    %c0_18 = arith.constant 0 : index
    %c0_19 = arith.constant 0 : index
    %c0_20 = arith.constant 0 : index
    %35 = vector.load %arg3[%c0_18, %c0_19, %c0_20] : memref<2x128x128xbf16, #tpu.memory_space<vmem>>, vector<2x128x128xbf16>
    tpu.vector_store %arg3[%c0_18, %c0_19, %c0_20], %34 {strides = array<i32>} : memref<2x128x128xbf16, #tpu.memory_space<vmem>>, vector<2x128x128xbf16>,
    %36 = arith.truncf %14 : vector<128x32xf32> to vector<128x32xbf16>
    %c0_21 = arith.constant 0 : index
    %c0_22 = arith.constant 0 : index
    %c0_23 = arith.constant 0 : index
    %37 = vector.load %arg3[%c0_21, %c0_22, %c0_23] : memref<2x128x128xbf16, #tpu.memory_space<vmem>>, vector<1x128x32xbf16>
    %38 = vector.shape_cast %37 : vector<1x128x32xbf16> to vector<128x32xbf16>
    %39 = vector.shape_cast %36 : vector<128x32xbf16> to vector<1x128x32xbf16>
    tpu.vector_store %arg3[%c0_21, %c0_22, %c0_23], %39 {strides = array<i32>} : memref<2x128x128xbf16, #tpu.memory_space<vmem>>, vector<1x128x32xbf16>,
    %40 = arith.truncf %21 : vector<128x32xf32> to vector<128x32xbf16>
    %c1 = arith.constant 1 : index
    %c0_24 = arith.constant 0 : index
    %c0_25 = arith.constant 0 : index
    %41 = vector.load %arg3[%c1, %c0_24, %c0_25] : memref<2x128x128xbf16, #tpu.memory_space<vmem>>, vector<1x128x32xbf16>
    %42 = vector.shape_cast %41 : vector<1x128x32xbf16> to vector<128x32xbf16>
    %43 = vector.shape_cast %40 : vector<128x32xbf16> to vector<1x128x32xbf16>
    tpu.vector_store %arg3[%c1, %c0_24, %c0_25], %43 {strides = array<i32>} : memref<2x128x128xbf16, #tpu.memory_space<vmem>>, vector<1x128x32xbf16>,
    return
  }
  func.func @transform_0(%arg0: i32) -> (i32, i32) {
    %c0_i32 = arith.constant 0 : i32
    %c0_i32_0 = arith.constant 0 : i32
    return %arg0, %c0_i32 : i32, i32
  }
  func.func @transform_1(%arg0: i32) -> (i32, i32) {
    %c0_i32 = arith.constant 0 : i32
    %c0_i32_0 = arith.constant 0 : i32
    return %arg0, %c0_i32 : i32, i32
  }
  func.func @transform_2(%arg0: i32) -> (i32, i32, i32) {
    %c0_i32 = arith.constant 0 : i32
    %c0_i32_0 = arith.constant 0 : i32
    %c0_i32_1 = arith.constant 0 : i32
    return %c0_i32, %arg0, %c0_i32_0 : i32, i32, i32
  }
  func.func @transform_3(%arg0: i32) -> (i32, i32) {
    %c0_i32 = arith.constant 0 : i32
    %c0_i32_0 = arith.constant 0 : i32
    return %arg0, %c0_i32 : i32, i32
  }
  func.func @transform_4(%arg0: i32) -> (i32, i32) {
    %c0_i32 = arith.constant 0 : i32
    %c0_i32_0 = arith.constant 0 : i32
    return %arg0, %c0_i32 : i32, i32
  }
  func.func @transform_5(%arg0: i32) -> (i32, i32) {
    %c0_i32 = arith.constant 0 : i32
    %c0_i32_0 = arith.constant 0 : i32
    return %arg0, %c0_i32 : i32, i32
  }
}

</mosaic_0001>

<llo_original>
// kernel: tpu_custom_call.1
$region0: #{tpu_custom_call.1}
  #allocation0 [shape = 'u32[]', space=smem, size = 0x4, offset = 0x4, fixed_abs, tag = 'smem constant byte address 0x4 - core index']
  #allocation1 [shape = 'u32[72,128]{1,0:T(1,128)}', space=vmem, size = 0x9000, scoped, tag = 'internal scratch']
  %s0 = inlined_call_operand.vmem [shape: f32[128,32], index: 0, kind: input, shape index: {}]
  %s1 = inlined_call_operand.vmem [shape: f32[128,32], index: 1, kind: input, shape index: {}]
  %s2 = inlined_call_operand.hbm [shape: bf16[2,128,128], index: 2, kind: output, shape index: {0}]
  %s3 = inlined_call_operand.vmem [shape: f32[128,1], index: 3, kind: output, shape index: {1}]
  %s4 = inlined_call_operand.vmem [shape: f32[128,1], index: 4, kind: output, shape index: {2}]
  %s5 = inlined_call_operand.vmem [shape: f32[128,1], index: 5, kind: output, shape index: {3}]
  %6 = xla_tuple %s2, %s3, %s4, %s5
  %s7 = sld [smem:[#allocation0]]
  $region42: #{tpu_custom_call.1} parent=0
    _
  %s9 = ssub.s32 1, %s7
  %s10 = scalar_select 0, %s9, %s7
  $region1: #{tpu_custom_call.1} parent=0
    #allocation2 [shape = 'u8[65536]{0}', space=vmem, size = 0x10000, scoped, tag = 'output window, operand 0, single buffered']
    #allocation3 [shape = 's32[1]{0}', space=sflag, size = 0x4, scoped, tag = 'scoped memory for tpu_custom_call.1']
    %11 = vsyncpa [#allocation3], 0
    // Predicated region
    $region2: #{tpu_custom_call.1} parent=1 // pred_check
      _
    $region3: #{tpu_custom_call.1} parent=1 // pred_check_branch
      %13 = sbr.rel (0) target = $region5
    $region4: #{tpu_custom_call.1} parent=1 // pred_region
      _
    $region5: #{tpu_custom_call.1} parent=1 // pred_fallthru
      _
    // Predicated region
    $region6: #{tpu_custom_call.1} parent=1 // pred_check
      _
    $region7: #{tpu_custom_call.1} parent=1 // pred_check_branch
      %15 = sbr.rel (0) target = $region9
    $region8: #{tpu_custom_call.1} parent=1 // pred_region
      _
    $region9: #{tpu_custom_call.1} parent=1 // pred_fallthru
      _
    %v17 = vld [vmem:[%s0] sm:$0xff]
    %v18 = vld [vmem:[%s0 + $0x8] sm:$0xff]
    %v19 = vld [vmem:[%s0 + $0x10] sm:$0xff]
    %v20 = vld [vmem:[%s0 + $0x18] sm:$0xff]
    %v21 = vld [vmem:[%s0 + $0x20] sm:$0xff]
    %v22 = vld [vmem:[%s0 + $0x28] sm:$0xff]
    %v23 = vld [vmem:[%s0 + $0x30] sm:$0xff]
    %v24 = vld [vmem:[%s0 + $0x38] sm:$0xff]
    %v25 = vld [vmem:[%s0 + $0x40] sm:$0xff]
    %v26 = vld [vmem:[%s0 + $0x48] sm:$0xff]
    %v27 = vld [vmem:[%s0 + $0x50] sm:$0xff]
    %v28 = vld [vmem:[%s0 + $0x58] sm:$0xff]
    %v29 = vld [vmem:[%s0 + $0x60] sm:$0xff]
    %v30 = vld [vmem:[%s0 + $0x68] sm:$0xff]
    %v31 = vld [vmem:[%s0 + $0x70] sm:$0xff]
    %v32 = vld [vmem:[%s0 + $0x78] sm:$0xff]
    %v33 = vld [vmem:[%s1] sm:$0xff]
    %v34 = vld [vmem:[%s1 + $0x8] sm:$0xff]
    %v35 = vld [vmem:[%s1 + $0x10] sm:$0xff]
    %v36 = vld [vmem:[%s1 + $0x18] sm:$0xff]
    %v37 = vld [vmem:[%s1 + $0x20] sm:$0xff]
    %v38 = vld [vmem:[%s1 + $0x28] sm:$0xff]
    %v39 = vld [vmem:[%s1 + $0x30] sm:$0xff]
    %v40 = vld [vmem:[%s1 + $0x38] sm:$0xff]
    %v41 = vld [vmem:[%s1 + $0x40] sm:$0xff]
    %v42 = vld [vmem:[%s1 + $0x48] sm:$0xff]
    %v43 = vld [vmem:[%s1 + $0x50] sm:$0xff]
    %v44 = vld [vmem:[%s1 + $0x58] sm:$0xff]
    %v45 = vld [vmem:[%s1 + $0x60] sm:$0xff]
    %v46 = vld [vmem:[%s1 + $0x68] sm:$0xff]
    %v47 = vld [vmem:[%s1 + $0x70] sm:$0xff]
    %v48 = vld [vmem:[%s1 + $0x78] sm:$0xff]
    %v49 = vmul.f32 %v17, %v17
    %v50 = vmul.f32 %v18, %v18
    %v51 = vmul.f32 %v19, %v19
    %v52 = vmul.f32 %v20, %v20
    %v53 = vmul.f32 %v21, %v21
    %v54 = vmul.f32 %v22, %v22
    %v55 = vmul.f32 %v23, %v23
    %v56 = vmul.f32 %v24, %v24
    %v57 = vmul.f32 %v25, %v25
    %v58 = vmul.f32 %v26, %v26
    %v59 = vmul.f32 %v27, %v27
    %v60 = vmul.f32 %v28, %v28
    %v61 = vmul.f32 %v29, %v29
    %v62 = vmul.f32 %v30, %v30
    %v63 = vmul.f32 %v31, %v31
    %v64 = vmul.f32 %v32, %v32
    %vm65 = vcmask 261120
    %v66 = vsel %vm65, %v49, 0.0
    %67 = vadd.xlane.f32.xlu0 %v66
    %v68 = vpop.xlane.xlu0 %67
    %v69 = vsel %vm65, %v50, 0.0
    %70 = vadd.xlane.f32.xlu0 %v69
    %v71 = vpop.xlane.xlu0 %70
    %v72 = vsel %vm65, %v51, 0.0
    %73 = vadd.xlane.f32.xlu0 %v72
    %v74 = vpop.xlane.xlu0 %73
    %v75 = vsel %vm65, %v52, 0.0
    %76 = vadd.xlane.f32.xlu0 %v75
    %v77 = vpop.xlane.xlu0 %76
    %v78 = vsel %vm65, %v53, 0.0
    %79 = vadd.xlane.f32.xlu0 %v78
    %v80 = vpop.xlane.xlu0 %79
    %v81 = vsel %vm65, %v54, 0.0
    %82 = vadd.xlane.f32.xlu0 %v81
    %v83 = vpop.xlane.xlu0 %82
    %v84 = vsel %vm65, %v55, 0.0
    %85 = vadd.xlane.f32.xlu0 %v84
    %v86 = vpop.xlane.xlu0 %85
    %v87 = vsel %vm65, %v56, 0.0
    %88 = vadd.xlane.f32.xlu0 %v87
    %v89 = vpop.xlane.xlu0 %88
    %v90 = vsel %vm65, %v57, 0.0
    %91 = vadd.xlane.f32.xlu0 %v90
    %v92 = vpop.xlane.xlu0 %91
    %v93 = vsel %vm65, %v58, 0.0
    %94 = vadd.xlane.f32.xlu0 %v93
    %v95 = vpop.xlane.xlu0 %94
    %v96 = vsel %vm65, %v59, 0.0
    %97 = vadd.xlane.f32.xlu0 %v96
    %v98 = vpop.xlane.xlu0 %97
    %v99 = vsel %vm65, %v60, 0.0
    %100 = vadd.xlane.f32.xlu0 %v99
    %v101 = vpop.xlane.xlu0 %100
    %v102 = vsel %vm65, %v61, 0.0
    %103 = vadd.xlane.f32.xlu0 %v102
    %v104 = vpop.xlane.xlu0 %103
    %v105 = vsel %vm65, %v62, 0.0
    %106 = vadd.xlane.f32.xlu0 %v105
    %v107 = vpop.xlane.xlu0 %106
    %v108 = vsel %vm65, %v63, 0.0
    %109 = vadd.xlane.f32.xlu0 %v108
    %v110 = vpop.xlane.xlu0 %109
    %v111 = vsel %vm65, %v64, 0.0
    %112 = vadd.xlane.f32.xlu0 %v111
    %v113 = vpop.xlane.xlu0 %112
    %v114 = vmul.f32 %v33, %v33
    %v115 = vmul.f32 %v34, %v34
    %v116 = vmul.f32 %v35, %v35
    %v117 = vmul.f32 %v36, %v36
    %v118 = vmul.f32 %v37, %v37
    %v119 = vmul.f32 %v38, %v38
    %v120 = vmul.f32 %v39, %v39
    %v121 = vmul.f32 %v40, %v40
    %v122 = vmul.f32 %v41, %v41
    %v123 = vmul.f32 %v42, %v42
    %v124 = vmul.f32 %v43, %v43
    %v125 = vmul.f32 %v44, %v44
    %v126 = vmul.f32 %v45, %v45
    %v127 = vmul.f32 %v46, %v46
    %v128 = vmul.f32 %v47, %v47
    %v129 = vmul.f32 %v48, %v48
    %v130 = vsel %vm65, %v114, 0.0
    %131 = vadd.xlane.f32.xlu0 %v130
    %v132 = vpop.xlane.xlu0 %131
    %v133 = vsel %vm65, %v115, 0.0
    %134 = vadd.xlane.f32.xlu0 %v133
    %v135 = vpop.xlane.xlu0 %134
    %v136 = vsel %vm65, %v116, 0.0
    %137 = vadd.xlane.f32.xlu0 %v136
    %v138 = vpop.xlane.xlu0 %137
    %v139 = vsel %vm65, %v117, 0.0
    %140 = vadd.xlane.f32.xlu0 %v139
    %v141 = vpop.xlane.xlu0 %140
    %v142 = vsel %vm65, %v118, 0.0
    %143 = vadd.xlane.f32.xlu0 %v142
    %v144 = vpop.xlane.xlu0 %143
    %v145 = vsel %vm65, %v119, 0.0
    %146 = vadd.xlane.f32.xlu0 %v145
    %v147 = vpop.xlane.xlu0 %146
    %v148 = vsel %vm65, %v120, 0.0
    %149 = vadd.xlane.f32.xlu0 %v148
    %v150 = vpop.xlane.xlu0 %149
    %v151 = vsel %vm65, %v121, 0.0
    %152 = vadd.xlane.f32.xlu0 %v151
    %v153 = vpop.xlane.xlu0 %152
    %v154 = vsel %vm65, %v122, 0.0
    %155 = vadd.xlane.f32.xlu0 %v154
    %v156 = vpop.xlane.xlu0 %155
    %v157 = vsel %vm65, %v123, 0.0
    %158 = vadd.xlane.f32.xlu0 %v157
    %v159 = vpop.xlane.xlu0 %158
    %v160 = vsel %vm65, %v124, 0.0
    %161 = vadd.xlane.f32.xlu0 %v160
    %v162 = vpop.xlane.xlu0 %161
    %v163 = vsel %vm65, %v125, 0.0
    %164 = vadd.xlane.f32.xlu0 %v163
    %v165 = vpop.xlane.xlu0 %164
    %v166 = vsel %vm65, %v126, 0.0
    %167 = vadd.xlane.f32.xlu0 %v166
    %v168 = vpop.xlane.xlu0 %167
    %v169 = vsel %vm65, %v127, 0.0
    %170 = vadd.xlane.f32.xlu0 %v169
    %v171 = vpop.xlane.xlu0 %170
    %v172 = vsel %vm65, %v128, 0.0
    %173 = vadd.xlane.f32.xlu0 %v172
    %v174 = vpop.xlane.xlu0 %173
    %v175 = vsel %vm65, %v129, 0.0
    %176 = vadd.xlane.f32.xlu0 %v175
    %v177 = vpop.xlane.xlu0 %176
    %v178 = vmax.f32 %v68, 1e-24
    %v179 = vmax.f32 %v71, 1e-24
    %v180 = vmax.f32 %v74, 1e-24
    %v181 = vmax.f32 %v77, 1e-24
    %v182 = vmax.f32 %v80, 1e-24
    %v183 = vmax.f32 %v83, 1e-24
    %v184 = vmax.f32 %v86, 1e-24
    %v185 = vmax.f32 %v89, 1e-24
    %v186 = vmax.f32 %v92, 1e-24
    %v187 = vmax.f32 %v95, 1e-24
    %v188 = vmax.f32 %v98, 1e-24
    %v189 = vmax.f32 %v101, 1e-24
    %v190 = vmax.f32 %v104, 1e-24
    %v191 = vmax.f32 %v107, 1e-24
    %v192 = vmax.f32 %v110, 1e-24
    %v193 = vmax.f32 %v113, 1e-24
    %v194 = vrsqrt.pop %v178
    %v195 = vmul.f32 %v194, %v178
    %v196 = vmul.f32 %v195, %v194
    %v197 = vmul.f32 0.5, %v196
    %v198 = vsub.f32 1.5, %v197
    %v199 = vmul.f32 %v194, %v198
    %vm200 = vweird.f32 %v178
    %vm201 = vweird.f32 %v194
    %vm202 = vmor %vm200, %vm201
    %v203 = vsel %vm202, %v194, %v199
    %v204 = vrsqrt.pop %v179
    %v205 = vmul.f32 %v204, %v179
    %v206 = vmul.f32 %v205, %v204
    %v207 = vmul.f32 0.5, %v206
    %v208 = vsub.f32 1.5, %v207
    %v209 = vmul.f32 %v204, %v208
    %vm210 = vweird.f32 %v179
    %vm211 = vweird.f32 %v204
    %vm212 = vmor %vm210, %vm211
    %v213 = vsel %vm212, %v204, %v209
    %v214 = vrsqrt.pop %v180
    %v215 = vmul.f32 %v214, %v180
    %v216 = vmul.f32 %v215, %v214
    %v217 = vmul.f32 0.5, %v216
    %v218 = vsub.f32 1.5, %v217
    %v219 = vmul.f32 %v214, %v218
    %vm220 = vweird.f32 %v180
    %vm221 = vweird.f32 %v214
    %vm222 = vmor %vm220, %vm221
    %v223 = vsel %vm222, %v214, %v219
    %v224 = vrsqrt.pop %v181
    %v225 = vmul.f32 %v224, %v181
    %v226 = vmul.f32 %v225, %v224
    %v227 = vmul.f32 0.5, %v226
    %v228 = vsub.f32 1.5, %v227
    %v229 = vmul.f32 %v224, %v228
    %vm230 = vweird.f32 %v181
    %vm231 = vweird.f32 %v224
    %vm232 = vmor %vm230, %vm231
    %v233 = vsel %vm232, %v224, %v229
    %v234 = vrsqrt.pop %v182
    %v235 = vmul.f32 %v234, %v182
    %v236 = vmul.f32 %v235, %v234
    %v237 = vmul.f32 0.5, %v236
    %v238 = vsub.f32 1.5, %v237
    %v239 = vmul.f32 %v234, %v238
    %vm240 = vweird.f32 %v182
    %vm241 = vweird.f32 %v234
    %vm242 = vmor %vm240, %vm241
    %v243 = vsel %vm242, %v234, %v239
    %v244 = vrsqrt.pop %v183
    %v245 = vmul.f32 %v244, %v183
    %v246 = vmul.f32 %v245, %v244
    %v247 = vmul.f32 0.5, %v246
    %v248 = vsub.f32 1.5, %v247
    %v249 = vmul.f32 %v244, %v248
    %vm250 = vweird.f32 %v183
    %vm251 = vweird.f32 %v244
    %vm252 = vmor %vm250, %vm251
    %v253 = vsel %vm252, %v244, %v249
    %v254 = vrsqrt.pop %v184
    %v255 = vmul.f32 %v254, %v184
    %v256 = vmul.f32 %v255, %v254
    %v257 = vmul.f32 0.5, %v256
    %v258 = vsub.f32 1.5, %v257
    %v259 = vmul.f32 %v254, %v258
    %vm260 = vweird.f32 %v184
    %vm261 = vweird.f32 %v254
    %vm262 = vmor %vm260, %vm261
    %v263 = vsel %vm262, %v254, %v259
    %v264 = vrsqrt.pop %v185
    %v265 = vmul.f32 %v264, %v185
    %v266 = vmul.f32 %v265, %v264
    %v267 = vmul.f32 0.5, %v266
    %v268 = vsub.f32 1.5, %v267
    %v269 = vmul.f32 %v264, %v268
    %vm270 = vweird.f32 %v185
    %vm271 = vweird.f32 %v264
    %vm272 = vmor %vm270, %vm271
    %v273 = vsel %vm272, %v264, %v269
    %v274 = vrsqrt.pop %v186
    %v275 = vmul.f32 %v274, %v186
    %v276 = vmul.f32 %v275, %v274
    %v277 = vmul.f32 0.5, %v276
    %v278 = vsub.f32 1.5, %v277
    %v279 = vmul.f32 %v274, %v278
    %vm280 = vweird.f32 %v186
    %vm281 = vweird.f32 %v274
    %vm282 = vmor %vm280, %vm281
    %v283 = vsel %vm282, %v274, %v279
    %v284 = vrsqrt.pop %v187
    %v285 = vmul.f32 %v284, %v187
    %v286 = vmul.f32 %v285, %v284
    %v287 = vmul.f32 0.5, %v286
    %v288 = vsub.f32 1.5, %v287
    %v289 = vmul.f32 %v284, %v288
    %vm290 = vweird.f32 %v187
    %vm291 = vweird.f32 %v284
    %vm292 = vmor %vm290, %vm291
    %v293 = vsel %vm292, %v284, %v289
    %v294 = vrsqrt.pop %v188
    %v295 = vmul.f32 %v294, %v188
    %v296 = vmul.f32 %v295, %v294
    %v297 = vmul.f32 0.5, %v296
    %v298 = vsub.f32 1.5, %v297
    %v299 = vmul.f32 %v294, %v298
    %vm300 = vweird.f32 %v188
    %vm301 = vweird.f32 %v294
    %vm302 = vmor %vm300, %vm301
    %v303 = vsel %vm302, %v294, %v299
    %v304 = vrsqrt.pop %v189
    %v305 = vmul.f32 %v304, %v189
    %v306 = vmul.f32 %v305, %v304
    %v307 = vmul.f32 0.5, %v306
    %v308 = vsub.f32 1.5, %v307
    %v309 = vmul.f32 %v304, %v308
    %vm310 = vweird.f32 %v189
    %vm311 = vweird.f32 %v304
    %vm312 = vmor %vm310, %vm311
    %v313 = vsel %vm312, %v304, %v309
    %v314 = vrsqrt.pop %v190
    %v315 = vmul.f32 %v314, %v190
    %v316 = vmul.f32 %v315, %v314
    %v317 = vmul.f32 0.5, %v316
    %v318 = vsub.f32 1.5, %v317
    %v319 = vmul.f32 %v314, %v318
    %vm320 = vweird.f32 %v190
    %vm321 = vweird.f32 %v314
    %vm322 = vmor %vm320, %vm321
    %v323 = vsel %vm322, %v314, %v319
    %v324 = vrsqrt.pop %v191
    %v325 = vmul.f32 %v324, %v191
    %v326 = vmul.f32 %v325, %v324
    %v327 = vmul.f32 0.5, %v326
    %v328 = vsub.f32 1.5, %v327
    %v329 = vmul.f32 %v324, %v328
    %vm330 = vweird.f32 %v191
    %vm331 = vweird.f32 %v324
    %vm332 = vmor %vm330, %vm331
    %v333 = vsel %vm332, %v324, %v329
    %v334 = vrsqrt.pop %v192
    %v335 = vmul.f32 %v334, %v192
    %v336 = vmul.f32 %v335, %v334
    %v337 = vmul.f32 0.5, %v336
    %v338 = vsub.f32 1.5, %v337
    %v339 = vmul.f32 %v334, %v338
    %vm340 = vweird.f32 %v192
    %vm341 = vweird.f32 %v334
    %vm342 = vmor %vm340, %vm341
    %v343 = vsel %vm342, %v334, %v339
    %v344 = vrsqrt.pop %v193
    %v345 = vmul.f32 %v344, %v193
    %v346 = vmul.f32 %v345, %v344
    %v347 = vmul.f32 0.5, %v346
    %v348 = vsub.f32 1.5, %v347
    %v349 = vmul.f32 %v344, %v348
    %vm350 = vweird.f32 %v193
    %vm351 = vweird.f32 %v344
    %vm352 = vmor %vm350, %vm351
    %v353 = vsel %vm352, %v344, %v349
    %v354 = vmul.f32 %v203, 1.4142135
    %v355 = vmul.f32 %v213, 1.4142135
    %v356 = vmul.f32 %v223, 1.4142135
    %v357 = vmul.f32 %v233, 1.4142135
    %v358 = vmul.f32 %v243, 1.4142135
    %v359 = vmul.f32 %v253, 1.4142135
    %v360 = vmul.f32 %v263, 1.4142135
    %v361 = vmul.f32 %v273, 1.4142135
    %v362 = vmul.f32 %v283, 1.4142135
    %v363 = vmul.f32 %v293, 1.4142135
    %v364 = vmul.f32 %v303, 1.4142135
    %v365 = vmul.f32 %v313, 1.4142135
    %v366 = vmul.f32 %v323, 1.4142135
    %v367 = vmul.f32 %v333, 1.4142135
    %v368 = vmul.f32 %v343, 1.4142135
    %v369 = vmul.f32 %v353, 1.4142135
    %v370 = vmul.f32 %v17, %v354
    %v371 = vmul.f32 %v18, %v355
    %v372 = vmul.f32 %v19, %v356
    %v373 = vmul.f32 %v20, %v357
    %v374 = vmul.f32 %v21, %v358
    %v375 = vmul.f32 %v22, %v359
    %v376 = vmul.f32 %v23, %v360
    %v377 = vmul.f32 %v24, %v361
    %v378 = vmul.f32 %v25, %v362
    %v379 = vmul.f32 %v26, %v363
    %v380 = vmul.f32 %v27, %v364
    %v381 = vmul.f32 %v28, %v365
    %v382 = vmul.f32 %v29, %v366
    %v383 = vmul.f32 %v30, %v367
    %v384 = vmul.f32 %v31, %v368
    %v385 = vmul.f32 %v32, %v369
    %v386 = vmax.f32 %v132, 1e-24
    %v387 = vmax.f32 %v135, 1e-24
    %v388 = vmax.f32 %v138, 1e-24
    %v389 = vmax.f32 %v141, 1e-24
    %v390 = vmax.f32 %v144, 1e-24
    %v391 = vmax.f32 %v147, 1e-24
    %v392 = vmax.f32 %v150, 1e-24
    %v393 = vmax.f32 %v153, 1e-24
    %v394 = vmax.f32 %v156, 1e-24
    %v395 = vmax.f32 %v159, 1e-24
    %v396 = vmax.f32 %v162, 1e-24
    %v397 = vmax.f32 %v165, 1e-24
    %v398 = vmax.f32 %v168, 1e-24
    %v399 = vmax.f32 %v171, 1e-24
    %v400 = vmax.f32 %v174, 1e-24
    %v401 = vmax.f32 %v177, 1e-24
    %v402 = vrsqrt.pop %v386
    %v403 = vmul.f32 %v402, %v386
    %v404 = vmul.f32 %v403, %v402
    %v405 = vmul.f32 0.5, %v404
    %v406 = vsub.f32 1.5, %v405
    %v407 = vmul.f32 %v402, %v406
    %vm408 = vweird.f32 %v386
    %vm409 = vweird.f32 %v402
    %vm410 = vmor %vm408, %vm409
    %v411 = vsel %vm410, %v402, %v407
    %v412 = vrsqrt.pop %v387
    %v413 = vmul.f32 %v412, %v387
    %v414 = vmul.f32 %v413, %v412
    %v415 = vmul.f32 0.5, %v414
    %v416 = vsub.f32 1.5, %v415
    %v417 = vmul.f32 %v412, %v416
    %vm418 = vweird.f32 %v387
    %vm419 = vweird.f32 %v412
    %vm420 = vmor %vm418, %vm419
    %v421 = vsel %vm420, %v412, %v417
    %v422 = vrsqrt.pop %v388
    %v423 = vmul.f32 %v422, %v388
    %v424 = vmul.f32 %v423, %v422
    %v425 = vmul.f32 0.5, %v424
    %v426 = vsub.f32 1.5, %v425
    %v427 = vmul.f32 %v422, %v426
    %vm428 = vweird.f32 %v388
    %vm429 = vweird.f32 %v422
    %vm430 = vmor %vm428, %vm429
    %v431 = vsel %vm430, %v422, %v427
    %v432 = vrsqrt.pop %v389
    %v433 = vmul.f32 %v432, %v389
    %v434 = vmul.f32 %v433, %v432
    %v435 = vmul.f32 0.5, %v434
    %v436 = vsub.f32 1.5, %v435
    %v437 = vmul.f32 %v432, %v436
    %vm438 = vweird.f32 %v389
    %vm439 = vweird.f32 %v432
    %vm440 = vmor %vm438, %vm439
    %v441 = vsel %vm440, %v432, %v437
    %v442 = vrsqrt.pop %v390
    %v443 = vmul.f32 %v442, %v390
    %v444 = vmul.f32 %v443, %v442
    %v445 = vmul.f32 0.5, %v444
    %v446 = vsub.f32 1.5, %v445
    %v447 = vmul.f32 %v442, %v446
    %vm448 = vweird.f32 %v390
    %vm449 = vweird.f32 %v442
    %vm450 = vmor %vm448, %vm449
    %v451 = vsel %vm450, %v442, %v447
    %v452 = vrsqrt.pop %v391
    %v453 = vmul.f32 %v452, %v391
    %v454 = vmul.f32 %v453, %v452
    %v455 = vmul.f32 0.5, %v454
    %v456 = vsub.f32 1.5, %v455
    %v457 = vmul.f32 %v452, %v456
    %vm458 = vweird.f32 %v391
    %vm459 = vweird.f32 %v452
    %vm460 = vmor %vm458, %vm459
    %v461 = vsel %vm460, %v452, %v457
    %v462 = vrsqrt.pop %v392
    %v463 = vmul.f32 %v462, %v392
    %v464 = vmul.f32 %v463, %v462
    %v465 = vmul.f32 0.5, %v464
    %v466 = vsub.f32 1.5, %v465
    %v467 = vmul.f32 %v462, %v466
    %vm468 = vweird.f32 %v392
    %vm469 = vweird.f32 %v462
    %vm470 = vmor %vm468, %vm469
    %v471 = vsel %vm470, %v462, %v467
    %v472 = vrsqrt.pop %v393
    %v473 = vmul.f32 %v472, %v393
    %v474 = vmul.f32 %v473, %v472
    %v475 = vmul.f32 0.5, %v474
    %v476 = vsub.f32 1.5, %v475
    %v477 = vmul.f32 %v472, %v476
    %vm478 = vweird.f32 %v393
    %vm479 = vweird.f32 %v472
    %vm480 = vmor %vm478, %vm479
    %v481 = vsel %vm480, %v472, %v477
    %v482 = vrsqrt.pop %v394
    %v483 = vmul.f32 %v482, %v394
    %v484 = vmul.f32 %v483, %v482
    %v485 = vmul.f32 0.5, %v484
    %v486 = vsub.f32 1.5, %v485
    %v487 = vmul.f32 %v482, %v486
    %vm488 = vweird.f32 %v394
    %vm489 = vweird.f32 %v482
    %vm490 = vmor %vm488, %vm489
    %v491 = vsel %vm490, %v482, %v487
    %v492 = vrsqrt.pop %v395
    %v493 = vmul.f32 %v492, %v395
    %v494 = vmul.f32 %v493, %v492
    %v495 = vmul.f32 0.5, %v494
    %v496 = vsub.f32 1.5, %v495
    %v497 = vmul.f32 %v492, %v496
    %vm498 = vweird.f32 %v395
    %vm499 = vweird.f32 %v492
    %vm500 = vmor %vm498, %vm499
    %v501 = vsel %vm500, %v492, %v497
    %v502 = vrsqrt.pop %v396
    %v503 = vmul.f32 %v502, %v396
    %v504 = vmul.f32 %v503, %v502
    %v505 = vmul.f32 0.5, %v504
    %v506 = vsub.f32 1.5, %v505
    %v507 = vmul.f32 %v502, %v506
    %vm508 = vweird.f32 %v396
    %vm509 = vweird.f32 %v502
    %vm510 = vmor %vm508, %vm509
    %v511 = vsel %vm510, %v502, %v507
    %v512 = vrsqrt.pop %v397
    %v513 = vmul.f32 %v512, %v397
    %v514 = vmul.f32 %v513, %v512
    %v515 = vmul.f32 0.5, %v514
    %v516 = vsub.f32 1.5, %v515
    %v517 = vmul.f32 %v512, %v516
    %vm518 = vweird.f32 %v397
    %vm519 = vweird.f32 %v512
    %vm520 = vmor %vm518, %vm519
    %v521 = vsel %vm520, %v512, %v517
    %v522 = vrsqrt.pop %v398
    %v523 = vmul.f32 %v522, %v398
    %v524 = vmul.f32 %v523, %v522
    %v525 = vmul.f32 0.5, %v524
    %v526 = vsub.f32 1.5, %v525
    %v527 = vmul.f32 %v522, %v526
    %vm528 = vweird.f32 %v398
    %vm529 = vweird.f32 %v522
    %vm530 = vmor %vm528, %vm529
    %v531 = vsel %vm530, %v522, %v527
    %v532 = vrsqrt.pop %v399
    %v533 = vmul.f32 %v532, %v399
    %v534 = vmul.f32 %v533, %v532
    %v535 = vmul.f32 0.5, %v534
    %v536 = vsub.f32 1.5, %v535
    %v537 = vmul.f32 %v532, %v536
    %vm538 = vweird.f32 %v399
    %vm539 = vweird.f32 %v532
    %vm540 = vmor %vm538, %vm539
    %v541 = vsel %vm540, %v532, %v537
    %v542 = vrsqrt.pop %v400
    %v543 = vmul.f32 %v542, %v400
    %v544 = vmul.f32 %v543, %v542
    %v545 = vmul.f32 0.5, %v544
    %v546 = vsub.f32 1.5, %v545
    %v547 = vmul.f32 %v542, %v546
    %vm548 = vweird.f32 %v400
    %vm549 = vweird.f32 %v542
    %vm550 = vmor %vm548, %vm549
    %v551 = vsel %vm550, %v542, %v547
    %v552 = vrsqrt.pop %v401
    %v553 = vmul.f32 %v552, %v401
    %v554 = vmul.f32 %v553, %v552
    %v555 = vmul.f32 0.5, %v554
    %v556 = vsub.f32 1.5, %v555
    %v557 = vmul.f32 %v552, %v556
    %vm558 = vweird.f32 %v401
    %vm559 = vweird.f32 %v552
    %vm560 = vmor %vm558, %vm559
    %v561 = vsel %vm560, %v552, %v557
    %v562 = vmul.f32 %v411, 1.4142135
    %v563 = vmul.f32 %v421, 1.4142135
    %v564 = vmul.f32 %v431, 1.4142135
    %v565 = vmul.f32 %v441, 1.4142135
    %v566 = vmul.f32 %v451, 1.4142135
    %v567 = vmul.f32 %v461, 1.4142135
    %v568 = vmul.f32 %v471, 1.4142135
    %v569 = vmul.f32 %v481, 1.4142135
    %v570 = vmul.f32 %v491, 1.4142135
    %v571 = vmul.f32 %v501, 1.4142135
    %v572 = vmul.f32 %v511, 1.4142135
    %v573 = vmul.f32 %v521, 1.4142135
    %v574 = vmul.f32 %v531, 1.4142135
    %v575 = vmul.f32 %v541, 1.4142135
    %v576 = vmul.f32 %v551, 1.4142135
    %v577 = vmul.f32 %v561, 1.4142135
    %v578 = vmul.f32 %v33, %v562
    %v579 = vmul.f32 %v34, %v563
    %v580 = vmul.f32 %v35, %v564
    %v581 = vmul.f32 %v36, %v565
    %v582 = vmul.f32 %v37, %v566
    %v583 = vmul.f32 %v38, %v567
    %v584 = vmul.f32 %v39, %v568
    %v585 = vmul.f32 %v40, %v569
    %v586 = vmul.f32 %v41, %v570
    %v587 = vmul.f32 %v42, %v571
    %v588 = vmul.f32 %v43, %v572
    %v589 = vmul.f32 %v44, %v573
    %v590 = vmul.f32 %v45, %v574
    %v591 = vmul.f32 %v46, %v575
    %v592 = vmul.f32 %v47, %v576
    %v593 = vmul.f32 %v48, %v577
    %v594 = vmul.f32 %v370, %v578
    %v595 = vmul.f32 %v371, %v579
    %v596 = vmul.f32 %v372, %v580
    %v597 = vmul.f32 %v373, %v581
    %v598 = vmul.f32 %v374, %v582
    %v599 = vmul.f32 %v375, %v583
    %v600 = vmul.f32 %v376, %v584
    %v601 = vmul.f32 %v377, %v585
    %v602 = vmul.f32 %v378, %v586
    %v603 = vmul.f32 %v379, %v587
    %v604 = vmul.f32 %v380, %v588
    %v605 = vmul.f32 %v381, %v589
    %v606 = vmul.f32 %v382, %v590
    %v607 = vmul.f32 %v383, %v591
    %v608 = vmul.f32 %v384, %v592
    %v609 = vmul.f32 %v385, %v593
    %v610 = vsel %vm65, %v594, 0.0
    %611 = vadd.xlane.f32.xlu0 %v610
    %v612 = vpop.xlane.xlu0 %611
    %v613 = vsel %vm65, %v595, 0.0
    %614 = vadd.xlane.f32.xlu0 %v613
    %v615 = vpop.xlane.xlu0 %614
    %v616 = vsel %vm65, %v596, 0.0
    %617 = vadd.xlane.f32.xlu0 %v616
    %v618 = vpop.xlane.xlu0 %617
    %v619 = vsel %vm65, %v597, 0.0
    %620 = vadd.xlane.f32.xlu0 %v619
    %v621 = vpop.xlane.xlu0 %620
    %v622 = vsel %vm65, %v598, 0.0
    %623 = vadd.xlane.f32.xlu0 %v622
    %v624 = vpop.xlane.xlu0 %623
    %v625 = vsel %vm65, %v599, 0.0
    %626 = vadd.xlane.f32.xlu0 %v625
    %v627 = vpop.xlane.xlu0 %626
    %v628 = vsel %vm65, %v600, 0.0
    %629 = vadd.xlane.f32.xlu0 %v628
    %v630 = vpop.xlane.xlu0 %629
    %v631 = vsel %vm65, %v601, 0.0
    %632 = vadd.xlane.f32.xlu0 %v631
    %v633 = vpop.xlane.xlu0 %632
    %v634 = vsel %vm65, %v602, 0.0
    %635 = vadd.xlane.f32.xlu0 %v634
    %v636 = vpop.xlane.xlu0 %635
    %v637 = vsel %vm65, %v603, 0.0
    %638 = vadd.xlane.f32.xlu0 %v637
    %v639 = vpop.xlane.xlu0 %638
    %v640 = vsel %vm65, %v604, 0.0
    %641 = vadd.xlane.f32.xlu0 %v640
    %v642 = vpop.xlane.xlu0 %641
    %v643 = vsel %vm65, %v605, 0.0
    %644 = vadd.xlane.f32.xlu0 %v643
    %v645 = vpop.xlane.xlu0 %644
    %v646 = vsel %vm65, %v606, 0.0
    %647 = vadd.xlane.f32.xlu0 %v646
    %v648 = vpop.xlane.xlu0 %647
    %v649 = vsel %vm65, %v607, 0.0
    %650 = vadd.xlane.f32.xlu0 %v649
    %v651 = vpop.xlane.xlu0 %650
    %v652 = vsel %vm65, %v608, 0.0
    %653 = vadd.xlane.f32.xlu0 %v652
    %v654 = vpop.xlane.xlu0 %653
    %v655 = vsel %vm65, %v609, 0.0
    %656 = vadd.xlane.f32.xlu0 %v655
    %v657 = vpop.xlane.xlu0 %656
    %vm658 = vcmask 7168
    %659 = vst.msk [vmem:[%s3] sm:$0xff] %vm658, %v612
    %660 = vst.msk [vmem:[%s3 + $0x8] sm:$0xff] %vm658, %v615
    %661 = vst.msk [vmem:[%s3 + $0x10] sm:$0xff] %vm658, %v618
    %662 = vst.msk [vmem:[%s3 + $0x18] sm:$0xff] %vm658, %v621
    %663 = vst.msk [vmem:[%s3 + $0x20] sm:$0xff] %vm658, %v624
    %664 = vst.msk [vmem:[%s3 + $0x28] sm:$0xff] %vm658, %v627
    %665 = vst.msk [vmem:[%s3 + $0x30] sm:$0xff] %vm658, %v630
    %666 = vst.msk [vmem:[%s3 + $0x38] sm:$0xff] %vm658, %v633
    %667 = vst.msk [vmem:[%s3 + $0x40] sm:$0xff] %vm658, %v636
    %668 = vst.msk [vmem:[%s3 + $0x48] sm:$0xff] %vm658, %v639
    %669 = vst.msk [vmem:[%s3 + $0x50] sm:$0xff] %vm658, %v642
    %670 = vst.msk [vmem:[%s3 + $0x58] sm:$0xff] %vm658, %v645
    %671 = vst.msk [vmem:[%s3 + $0x60] sm:$0xff] %vm658, %v648
    %672 = vst.msk [vmem:[%s3 + $0x68] sm:$0xff] %vm658, %v651
    %673 = vst.msk [vmem:[%s3 + $0x70] sm:$0xff] %vm658, %v654
    %674 = vst.msk [vmem:[%s3 + $0x78] sm:$0xff] %vm658, %v657
    %v675 = vmul.f32 %v370, %v370
    %v676 = vmul.f32 %v371, %v371
    %v677 = vmul.f32 %v372, %v372
    %v678 = vmul.f32 %v373, %v373
    %v679 = vmul.f32 %v374, %v374
    %v680 = vmul.f32 %v375, %v375
    %v681 = vmul.f32 %v376, %v376
    %v682 = vmul.f32 %v377, %v377
    %v683 = vmul.f32 %v378, %v378
    %v684 = vmul.f32 %v379, %v379
    %v685 = vmul.f32 %v380, %v380
    %v686 = vmul.f32 %v381, %v381
    %v687 = vmul.f32 %v382, %v382
    %v688 = vmul.f32 %v383, %v383
    %v689 = vmul.f32 %v384, %v384
    %v690 = vmul.f32 %v385, %v385
    %v691 = vsel %vm65, %v675, 0.0
    %692 = vadd.xlane.f32.xlu0 %v691
    %v693 = vpop.xlane.xlu0 %692
    %v694 = vsel %vm65, %v676, 0.0
    %695 = vadd.xlane.f32.xlu0 %v694
    %v696 = vpop.xlane.xlu0 %695
    %v697 = vsel %vm65, %v677, 0.0
    %698 = vadd.xlane.f32.xlu0 %v697
    %v699 = vpop.xlane.xlu0 %698
    %v700 = vsel %vm65, %v678, 0.0
    %701 = vadd.xlane.f32.xlu0 %v700
    %v702 = vpop.xlane.xlu0 %701
    %v703 = vsel %vm65, %v679, 0.0
    %704 = vadd.xlane.f32.xlu0 %v703
    %v705 = vpop.xlane.xlu0 %704
    %v706 = vsel %vm65, %v680, 0.0
    %707 = vadd.xlane.f32.xlu0 %v706
    %v708 = vpop.xlane.xlu0 %707
    %v709 = vsel %vm65, %v681, 0.0
    %710 = vadd.xlane.f32.xlu0 %v709
    %v711 = vpop.xlane.xlu0 %710
    %v712 = vsel %vm65, %v682, 0.0
    %713 = vadd.xlane.f32.xlu0 %v712
    %v714 = vpop.xlane.xlu0 %713
    %v715 = vsel %vm65, %v683, 0.0
    %716 = vadd.xlane.f32.xlu0 %v715
    %v717 = vpop.xlane.xlu0 %716
    %v718 = vsel %vm65, %v684, 0.0
    %719 = vadd.xlane.f32.xlu0 %v718
    %v720 = vpop.xlane.xlu0 %719
    %v721 = vsel %vm65, %v685, 0.0
    %722 = vadd.xlane.f32.xlu0 %v721
    %v723 = vpop.xlane.xlu0 %722
    %v724 = vsel %vm65, %v686, 0.0
    %725 = vadd.xlane.f32.xlu0 %v724
    %v726 = vpop.xlane.xlu0 %725
    %v727 = vsel %vm65, %v687, 0.0
    %728 = vadd.xlane.f32.xlu0 %v727
    %v729 = vpop.xlane.xlu0 %728
    %v730 = vsel %vm65, %v688, 0.0
    %731 = vadd.xlane.f32.xlu0 %v730
    %v732 = vpop.xlane.xlu0 %731
    %v733 = vsel %vm65, %v689, 0.0
    %734 = vadd.xlane.f32.xlu0 %v733
    %v735 = vpop.xlane.xlu0 %734
    %v736 = vsel %vm65, %v690, 0.0
    %737 = vadd.xlane.f32.xlu0 %v736
    %v738 = vpop.xlane.xlu0 %737
    %739 = vst.msk [vmem:[%s4] sm:$0xff] %vm658, %v693
    %740 = vst.msk [vmem:[%s4 + $0x8] sm:$0xff] %vm658, %v696
    %741 = vst.msk [vmem:[%s4 + $0x10] sm:$0xff] %vm658, %v699
    %742 = vst.msk [vmem:[%s4 + $0x18] sm:$0xff] %vm658, %v702
    %743 = vst.msk [vmem:[%s4 + $0x20] sm:$0xff] %vm658, %v705
    %744 = vst.msk [vmem:[%s4 + $0x28] sm:$0xff] %vm658, %v708
    %745 = vst.msk [vmem:[%s4 + $0x30] sm:$0xff] %vm658, %v711
    %746 = vst.msk [vmem:[%s4 + $0x38] sm:$0xff] %vm658, %v714
    %747 = vst.msk [vmem:[%s4 + $0x40] sm:$0xff] %vm658, %v717
    %748 = vst.msk [vmem:[%s4 + $0x48] sm:$0xff] %vm658, %v720
    %749 = vst.msk [vmem:[%s4 + $0x50] sm:$0xff] %vm658, %v723
    %750 = vst.msk [vmem:[%s4 + $0x58] sm:$0xff] %vm658, %v726
    %751 = vst.msk [vmem:[%s4 + $0x60] sm:$0xff] %vm658, %v729
    %752 = vst.msk [vmem:[%s4 + $0x68] sm:$0xff] %vm658, %v732
    %753 = vst.msk [vmem:[%s4 + $0x70] sm:$0xff] %vm658, %v735
    %754 = vst.msk [vmem:[%s4 + $0x78] sm:$0xff] %vm658, %v738
    %v755 = vmul.f32 %v578, %v578
    %v756 = vmul.f32 %v579, %v579
    %v757 = vmul.f32 %v580, %v580
    %v758 = vmul.f32 %v581, %v581
    %v759 = vmul.f32 %v582, %v582
    %v760 = vmul.f32 %v583, %v583
    %v761 = vmul.f32 %v584, %v584
    %v762 = vmul.f32 %v585, %v585
    %v763 = vmul.f32 %v586, %v586
    %v764 = vmul.f32 %v587, %v587
    %v765 = vmul.f32 %v588, %v588
    %v766 = vmul.f32 %v589, %v589
    %v767 = vmul.f32 %v590, %v590
    %v768 = vmul.f32 %v591, %v591
    %v769 = vmul.f32 %v592, %v592
    %v770 = vmul.f32 %v593, %v593
    %v771 = vsel %vm65, %v755, 0.0
    %772 = vadd.xlane.f32.xlu0 %v771
    %v773 = vpop.xlane.xlu0 %772
    %v774 = vsel %vm65, %v756, 0.0
    %775 = vadd.xlane.f32.xlu0 %v774
    %v776 = vpop.xlane.xlu0 %775
    %v777 = vsel %vm65, %v757, 0.0
    %778 = vadd.xlane.f32.xlu0 %v777
    %v779 = vpop.xlane.xlu0 %778
    %v780 = vsel %vm65, %v758, 0.0
    %781 = vadd.xlane.f32.xlu0 %v780
    %v782 = vpop.xlane.xlu0 %781
    %v783 = vsel %vm65, %v759, 0.0
    %784 = vadd.xlane.f32.xlu0 %v783
    %v785 = vpop.xlane.xlu0 %784
    %v786 = vsel %vm65, %v760, 0.0
    %787 = vadd.xlane.f32.xlu0 %v786
    %v788 = vpop.xlane.xlu0 %787
    %v789 = vsel %vm65, %v761, 0.0
    %790 = vadd.xlane.f32.xlu0 %v789
    %v791 = vpop.xlane.xlu0 %790
    %v792 = vsel %vm65, %v762, 0.0
    %793 = vadd.xlane.f32.xlu0 %v792
    %v794 = vpop.xlane.xlu0 %793
    %v795 = vsel %vm65, %v763, 0.0
    %796 = vadd.xlane.f32.xlu0 %v795
    %v797 = vpop.xlane.xlu0 %796
    %v798 = vsel %vm65, %v764, 0.0
    %799 = vadd.xlane.f32.xlu0 %v798
    %v800 = vpop.xlane.xlu0 %799
    %v801 = vsel %vm65, %v765, 0.0
    %802 = vadd.xlane.f32.xlu0 %v801
    %v803 = vpop.xlane.xlu0 %802
    %v804 = vsel %vm65, %v766, 0.0
    %805 = vadd.xlane.f32.xlu0 %v804
    %v806 = vpop.xlane.xlu0 %805
    %v807 = vsel %vm65, %v767, 0.0
    %808 = vadd.xlane.f32.xlu0 %v807
    %v809 = vpop.xlane.xlu0 %808
    %v810 = vsel %vm65, %v768, 0.0
    %811 = vadd.xlane.f32.xlu0 %v810
    %v812 = vpop.xlane.xlu0 %811
    %v813 = vsel %vm65, %v769, 0.0
    %814 = vadd.xlane.f32.xlu0 %v813
    %v815 = vpop.xlane.xlu0 %814
    %v816 = vsel %vm65, %v770, 0.0
    %817 = vadd.xlane.f32.xlu0 %v816
    %v818 = vpop.xlane.xlu0 %817
    %819 = vst.msk [vmem:[%s5] sm:$0xff] %vm658, %v773
    %820 = vst.msk [vmem:[%s5 + $0x8] sm:$0xff] %vm658, %v776
    %821 = vst.msk [vmem:[%s5 + $0x10] sm:$0xff] %vm658, %v779
    %822 = vst.msk [vmem:[%s5 + $0x18] sm:$0xff] %vm658, %v782
    %823 = vst.msk [vmem:[%s5 + $0x20] sm:$0xff] %vm658, %v785
    %824 = vst.msk [vmem:[%s5 + $0x28] sm:$0xff] %vm658, %v788
    %825 = vst.msk [vmem:[%s5 + $0x30] sm:$0xff] %vm658, %v791
    %826 = vst.msk [vmem:[%s5 + $0x38] sm:$0xff] %vm658, %v794
    %827 = vst.msk [vmem:[%s5 + $0x40] sm:$0xff] %vm658, %v797
    %828 = vst.msk [vmem:[%s5 + $0x48] sm:$0xff] %vm658, %v800
    %829 = vst.msk [vmem:[%s5 + $0x50] sm:$0xff] %vm658, %v803
    %830 = vst.msk [vmem:[%s5 + $0x58] sm:$0xff] %vm658, %v806
    %831 = vst.msk [vmem:[%s5 + $0x60] sm:$0xff] %vm658, %v809
    %832 = vst.msk [vmem:[%s5 + $0x68] sm:$0xff] %vm658, %v812
    %833 = vst.msk [vmem:[%s5 + $0x70] sm:$0xff] %vm658, %v815
    %834 = vst.msk [vmem:[%s5 + $0x78] sm:$0xff] %vm658, %v818
    %835 = vst [vmem:[#allocation2] sm:$0xf] 0
    %836 = vst [vmem:[#allocation2 + $0x4] sm:$0xf] 0
    %837 = vst [vmem:[#allocation2 + $0x8] sm:$0xf] 0
    %838 = vst [vmem:[#allocation2 + $0xc] sm:$0xf] 0
    %839 = vst [vmem:[#allocation2 + $0x10] sm:$0xf] 0
    %840 = vst [vmem:[#allocation2 + $0x14] sm:$0xf] 0
    %841 = vst [vmem:[#allocation2 + $0x18] sm:$0xf] 0
    %842 = vst [vmem:[#allocation2 + $0x1c] sm:$0xf] 0
    %843 = vst [vmem:[#allocation2 + $0x20] sm:$0xf] 0
    %844 = vst [vmem:[#allocation2 + $0x24] sm:$0xf] 0
    %845 = vst [vmem:[#allocation2 + $0x28] sm:$0xf] 0
    %846 = vst [vmem:[#allocation2 + $0x2c] sm:$0xf] 0
    %847 = vst [vmem:[#allocation2 + $0x30] sm:$0xf] 0
    %848 = vst [vmem:[#allocation2 + $0x34] sm:$0xf] 0
    %849 = vst [vmem:[#allocation2 + $0x38] sm:$0xf] 0
    %850 = vst [vmem:[#allocation2 + $0x3c] sm:$0xf] 0
    %851 = vst [vmem:[#allocation2 + $0x40] sm:$0xf] 0
    %852 = vst [vmem:[#allocation2 + $0x44] sm:$0xf] 0
    %853 = vst [vmem:[#allocation2 + $0x48] sm:$0xf] 0
    %854 = vst [vmem:[#allocation2 + $0x4c] sm:$0xf] 0
    %855 = vst [vmem:[#allocation2 + $0x50] sm:$0xf] 0
    %856 = vst [vmem:[#allocation2 + $0x54] sm:$0xf] 0
    %857 = vst [vmem:[#allocation2 + $0x58] sm:$0xf] 0
    %858 = vst [vmem:[#allocation2 + $0x5c] sm:$0xf] 0
    %859 = vst [vmem:[#allocation2 + $0x60] sm:$0xf] 0
    %860 = vst [vmem:[#allocation2 + $0x64] sm:$0xf] 0
    %861 = vst [vmem:[#allocation2 + $0x68] sm:$0xf] 0
    %862 = vst [vmem:[#allocation2 + $0x6c] sm:$0xf] 0
    %863 = vst [vmem:[#allocation2 + $0x70] sm:$0xf] 0
    %864 = vst [vmem:[#allocation2 + $0x74] sm:$0xf] 0
    %865 = vst [vmem:[#allocation2 + $0x78] sm:$0xf] 0
    %866 = vst [vmem:[#allocation2 + $0x7c] sm:$0xf] 0
    %v867 = vpack.c.bf16 %v370, %v370
    %v868 = vpack.c.bf16 %v371, %v371
    %v869 = vpack.c.bf16 %v372, %v372
    %v870 = vpack.c.bf16 %v373, %v373
    %v871 = vpack.c.bf16 %v374, %v374
    %v872 = vpack.c.bf16 %v375, %v375
    %v873 = vpack.c.bf16 %v376, %v376
    %v874 = vpack.c.bf16 %v377, %v377
    %v875 = vpack.c.bf16 %v378, %v378
    %v876 = vpack.c.bf16 %v379, %v379
    %v877 = vpack.c.bf16 %v380, %v380
    %v878 = vpack.c.bf16 %v381, %v381
    %v879 = vpack.c.bf16 %v382, %v382
    %v880 = vpack.c.bf16 %v383, %v383
    %v881 = vpack.c.bf16 %v384, %v384
    %v882 = vpack.c.bf16 %v385, %v385
    %vm883 = vcmask 257024
    %884 = vst.msk [vmem:[#allocation2] sm:$0xf] %vm883, %v867
    %885 = vst.msk [vmem:[#allocation2 + $0x4] sm:$0xf] %vm883, %v868
    %886 = vst.msk [vmem:[#allocation2 + $0x8] sm:$0xf] %vm883, %v869
    %887 = vst.msk [vmem:[#allocation2 + $0xc] sm:$0xf] %vm883, %v870
    %888 = vst.msk [vmem:[#allocation2 + $0x10] sm:$0xf] %vm883, %v871
    %889 = vst.msk [vmem:[#allocation2 + $0x14] sm:$0xf] %vm883, %v872
    %890 = vst.msk [vmem:[#allocation2 + $0x18] sm:$0xf] %vm883, %v873
    %891 = vst.msk [vmem:[#allocation2 + $0x1c] sm:$0xf] %vm883, %v874
    %892 = vst.msk [vmem:[#allocation2 + $0x20] sm:$0xf] %vm883, %v875
    %893 = vst.msk [vmem:[#allocation2 + $0x24] sm:$0xf] %vm883, %v876
    %894 = vst.msk [vmem:[#allocation2 + $0x28] sm:$0xf] %vm883, %v877
    %895 = vst.msk [vmem:[#allocation2 + $0x2c] sm:$0xf] %vm883, %v878
    %896 = vst.msk [vmem:[#allocation2 + $0x30] sm:$0xf] %vm883, %v879
    %897 = vst.msk [vmem:[#allocation2 + $0x34] sm:$0xf] %vm883, %v880
    %898 = vst.msk [vmem:[#allocation2 + $0x38] sm:$0xf] %vm883, %v881
    %899 = vst.msk [vmem:[#allocation2 + $0x3c] sm:$0xf] %vm883, %v882
    %v900 = vpack.c.bf16 %v578, %v578
    %v901 = vpack.c.bf16 %v579, %v579
    %v902 = vpack.c.bf16 %v580, %v580
    %v903 = vpack.c.bf16 %v581, %v581
    %v904 = vpack.c.bf16 %v582, %v582
    %v905 = vpack.c.bf16 %v583, %v583
    %v906 = vpack.c.bf16 %v584, %v584
    %v907 = vpack.c.bf16 %v585, %v585
    %v908 = vpack.c.bf16 %v586, %v586
    %v909 = vpack.c.bf16 %v587, %v587
    %v910 = vpack.c.bf16 %v588, %v588
    %v911 = vpack.c.bf16 %v589, %v589
    %v912 = vpack.c.bf16 %v590, %v590
    %v913 = vpack.c.bf16 %v591, %v591
    %v914 = vpack.c.bf16 %v592, %v592
    %v915 = vpack.c.bf16 %v593, %v593
    %s916 = scalar_lea.vmem [#allocation2], 64
    %917 = vst.msk [vmem:[%s916] sm:$0xf] %vm883, %v900
    %918 = vst.msk [vmem:[%s916 + $0x4] sm:$0xf] %vm883, %v901
    %919 = vst.msk [vmem:[%s916 + $0x8] sm:$0xf] %vm883, %v902
    %920 = vst.msk [vmem:[%s916 + $0xc] sm:$0xf] %vm883, %v903
    %921 = vst.msk [vmem:[%s916 + $0x10] sm:$0xf] %vm883, %v904
    %922 = vst.msk [vmem:[%s916 + $0x14] sm:$0xf] %vm883, %v905
    %923 = vst.msk [vmem:[%s916 + $0x18] sm:$0xf] %vm883, %v906
    %924 = vst.msk [vmem:[%s916 + $0x1c] sm:$0xf] %vm883, %v907
    %925 = vst.msk [vmem:[%s916 + $0x20] sm:$0xf] %vm883, %v908
    %926 = vst.msk [vmem:[%s916 + $0x24] sm:$0xf] %vm883, %v909
    %927 = vst.msk [vmem:[%s916 + $0x28] sm:$0xf] %vm883, %v910
    %928 = vst.msk [vmem:[%s916 + $0x2c] sm:$0xf] %vm883, %v911
    %929 = vst.msk [vmem:[%s916 + $0x30] sm:$0xf] %vm883, %v912
    %930 = vst.msk [vmem:[%s916 + $0x34] sm:$0xf] %vm883, %v913
    %931 = vst.msk [vmem:[%s916 + $0x38] sm:$0xf] %vm883, %v914
    %932 = vst.msk [vmem:[%s916 + $0x3c] sm:$0xf] %vm883, %v915
    // Predicated region
    $region10: #{tpu_custom_call.1} parent=1 // pred_check
      _
    $region11: #{tpu_custom_call.1} parent=1 // pred_check_branch
      %934 = sbr.rel (0) target = $region13
    $region12: #{tpu_custom_call.1} parent=1 // pred_region
      %936 = vsyncadd [#allocation3], 0
      %s937 = sshll.u32 [#allocation2], 4
      %s938 = int_to_ptr.vmem [resolvable:$true] %s937
      %s939 = sshll.u32 %s2, 4
      %s940 = int_to_ptr.hbm [resolvable:$true] %s939
      %945 = dma.vmem_to_hbm [thread:$0]  %s938, 2048, %s940, [#allocation3], 64, 64, 4
    $region13: #{tpu_custom_call.1} parent=1 // pred_fallthru
      _
    // Predicated region
    $region14: #{tpu_custom_call.1} parent=1 // pred_check
      _
    $region15: #{tpu_custom_call.1} parent=1 // pred_check_branch
      %947 = sbr.rel (0) target = $region17
    $region16: #{tpu_custom_call.1} parent=1 // pred_region
      _
    $region17: #{tpu_custom_call.1} parent=1 // pred_fallthru
      _
    // Predicated region
    $region18: #{tpu_custom_call.1} parent=1 // pred_check
      _
    $region19: #{tpu_custom_call.1} parent=1 // pred_check_branch
      %949 = sbr.rel (0) target = $region21
    $region20: #{tpu_custom_call.1} parent=1 // pred_region
      _
    $region21: #{tpu_custom_call.1} parent=1 // pred_fallthru
      _
    // Predicated region
    $region22: #{tpu_custom_call.1} parent=1 // pred_check
      _
    $region23: #{tpu_custom_call.1} parent=1 // pred_check_branch
      %951 = sbr.rel (0) target = $region25
    $region24: #{tpu_custom_call.1} parent=1 // pred_region
      _
    $region25: #{tpu_custom_call.1} parent=1 // pred_fallthru
      _
    // Predicated region
    $region26: #{tpu_custom_call.1} parent=1 // pred_check
      _
    $region27: #{tpu_custom_call.1} parent=1 // pred_check_branch
      %953 = sbr.rel (0) target = $region29
    $region28: #{tpu_custom_call.1} parent=1 // pred_region
      %955 = dma.done [#allocation3], 2048
    $region29: #{tpu_custom_call.1} parent=1 // pred_fallthru
      _
    // Predicated region
    $region30: #{tpu_custom_call.1} parent=1 // pred_check
      _
    $region31: #{tpu_custom_call.1} parent=1 // pred_check_branch
      %957 = sbr.rel (0) target = $region33
    $region32: #{tpu_custom_call.1} parent=1 // pred_region
      _
    $region33: #{tpu_custom_call.1} parent=1 // pred_fallthru
      _
    // Predicated region
    $region34: #{tpu_custom_call.1} parent=1 // pred_check
      _
    $region35: #{tpu_custom_call.1} parent=1 // pred_check_branch
      %959 = sbr.rel (0) target = $region37
    $region36: #{tpu_custom_call.1} parent=1 // pred_region
      _
    $region37: #{tpu_custom_call.1} parent=1 // pred_fallthru
      _
    // Predicated region
    $region38: #{tpu_custom_call.1} parent=1 // pred_check
      _
    $region39: #{tpu_custom_call.1} parent=1 // pred_check_branch
      %961 = sbr.rel (0) target = $region41
    $region40: #{tpu_custom_call.1} parent=1 // pred_region
      _
    $region41: #{tpu_custom_call.1} parent=1 // pred_fallthru
      _
    %962 = vsyncpa [#allocation3], 1

</llo_original>
